<compile_context>
chip_gen: v6e
topology: v6e:2x2x1
jax: 0.10.0
libtpu: 0.0.40
codegen_flags: <defaults>
</compile_context>

<pallas_src>
import math

import jax
import jax.numpy as jnp
from jax.experimental import pallas as pl
from jax.experimental.pallas import tpu as pltpu


def _round_up(v, m):
    return ((v + m - 1) // m) * m


def _choose_tile(total, max_tile, align):
    """Largest multiple of `align` <= max_tile that divides `total`.
    `total` must already be a multiple of `align`."""
    if total <= max_tile:
        return total
    t = (max_tile // align) * align
    while t > align:
        if total % t == 0:
            return t
        t -= align
    return align


def vera_kernel(x_ref, wt_ref, b0_ref, h_ref, bte_ref, o_ref):
    k = pl.program_id(2)

    @pl.when(k == 0)
    def _():
        # Once per (i, j) output block: bias + low-rank VeRA delta.
        #   h   = x @ A.T            (precomputed, k-invariant, bf16)
        #   Bte = diag(d) B.T diag(b) (folded on host, bf16)
        delta = jnp.dot(h_ref[...], bte_ref[...],
                        preferred_element_type=jnp.float32)       # (tm, tn) f32
        o_ref[...] = delta + b0_ref[...]

    # Frozen-linear partial sum, accumulated directly into the resident f32
    # output block (k is innermost -> block lives in VMEM across the k loop).
    o_ref[...] += jnp.dot(x_ref[...], wt_ref[...],
                          preferred_element_type=jnp.float32)


def prepare_vera_weights(W, b0, A, B, d_vec, b_vec, *,
                         tn_max=512, tk_max=512,
                         compute_dtype=jnp.bfloat16):
    """Pad / transpose / cast the frozen weights ONCE (hoisted out of the
    per-call path); fold the trainable d_vec / b_vec into the rank x out
    projection (cheap: rank x out)."""
    out_f, in_f = W.shape
    rank = A.shape[0]

    in_p = _round_up(in_f, 128)
    out_p = _round_up(out_f, 128)
    tk = _choose_tile(in_p, tk_max, 128)
    tn = _choose_tile(out_p, tn_max, 128)

    def pad2(a, rows, cols):
        return jnp.pad(a, ((0, rows - a.shape[0]), (0, cols - a.shape[1])))

    Wt = pad2(W.T, in_p, out_p).astype(compute_dtype)            # [in_p, out_p]
    # A.T stays f32: only used for the tiny per-call h = x @ A.T precompute.
    At = pad2(A.T, in_p, rank).astype(jnp.float32)               # [in_p, rank]
    # Fold diag(d_vec) and diag(b_vec) into B.T.
    Bte = (d_vec[:, None].astype(jnp.float32)
           * B.T.astype(jnp.float32)
           * b_vec[None, :].astype(jnp.float32))
    Bte = pad2(Bte, rank, out_p).astype(compute_dtype)           # [rank, out_p]
    b0p = pad2(b0.reshape(1, out_f).astype(jnp.float32), 1, out_p)

    return dict(Wt=Wt, At=At, Bte=Bte, b0=b0p,
                in_f=in_f, out_f=out_f, rank=rank,
                in_p=in_p, out_p=out_p, tk=tk, tn=tn,
                compute_dtype=compute_dtype)


def vera_apply(prep, x, *, tm_max=512):
    """x: [N, in_features] -> f32 [N, out_features]."""
    N, in_f = x.shape
    assert in_f == prep["in_f"]
    in_p, out_p, out_f = prep["in_p"], prep["out_p"], prep["out_f"]
    tk, tn, rank = prep["tk"], prep["tn"], prep["rank"]
    cdt = prep["compute_dtype"]

    tm = min(tm_max, _round_up(N, 16))          # 16 = bf16 sublane pack
    N_p = _round_up(N, tm)

    xp32 = jnp.pad(x.astype(jnp.float32), ((0, N_p - N), (0, in_p - in_f)))
    # Tiny low-rank projection precomputed once per call (f32 for accuracy,
    # then bf16 for the in-kernel delta matmul). This keeps the rank-8 matmul
    # out of the hot k-loop, where it would pad to full MXU width every step.
    h = (xp32 @ prep["At"]).astype(cdt)                           # [N_p, rank]
    xp = xp32.astype(cdt)                                         # [N_p, in_p]

    grid = (N_p // tm, out_p // tn, in_p // tk)

    # Rough double-buffered VMEM footprint; give the compiler explicit headroom
    # for large tiles while staying within v7x's 64 MiB physical VMEM.
    vmem_bytes = (2 * (tm * tk + tk * tn) * 2        # x / W.T tiles (bf16)
                  + 2 * tm * tn * 4                  # resident f32 out block
                  + 2 * (tn * 4 + tm * rank * 2 + rank * tn * 2)
                  + (1 << 20))
    vmem_limit = int(min(max(2 * vmem_bytes, 32 << 20), 64 << 20))

    out = pl.pallas_call(
        vera_kernel,
        out_shape=jax.ShapeDtypeStruct((N_p, out_p), jnp.float32),
        grid=grid,
        in_specs=[
            pl.BlockSpec((tm, tk), lambda i, j, k: (i, k)),      # x
            pl.BlockSpec((tk, tn), lambda i, j, k: (k, j)),      # W.T
            pl.BlockSpec((1, tn), lambda i, j, k: (0, j)),       # b0
            pl.BlockSpec((tm, rank), lambda i, j, k: (i, 0)),    # h = x @ A.T
            pl.BlockSpec((rank, tn), lambda i, j, k: (0, j)),    # diag(d) B.T diag(b)
        ],
        out_specs=pl.BlockSpec((tm, tn), lambda i, j, k: (i, j)),
        compiler_params=pltpu.CompilerParams(
            dimension_semantics=("parallel", "parallel", "arbitrary"),
            vmem_limit_bytes=vmem_limit),
    )(xp, prep["Wt"], prep["b0"], h, prep["Bte"])

    return out[:N, :out_f]


def vera_forward(x, W, b0, A, B, d_vec, b_vec, *,
                 tm=512, tn=512, tk=512, compute_dtype=jnp.bfloat16):
    """Convenience one-shot wrapper. For repeated calls, call
    prepare_vera_weights once and vera_apply per input."""
    prep = prepare_vera_weights(W, b0, A, B, d_vec, b_vec,
                                tn_max=tn, tk_max=tk,
                                compute_dtype=compute_dtype)
    return vera_apply(prep, x, tm_max=tm)


def _kaiming_uniform(key, shape, a=math.sqrt(5)):
    # Matches torch.nn.init.kaiming_uniform_ with fan_in = shape[1].
    fan_in = shape[1]
    gain = math.sqrt(2.0 / (1.0 + a * a))
    bound = gain * math.sqrt(3.0 / fan_in)
    return jax.random.uniform(key, shape, jnp.float32, minval=-bound, maxval=bound)


if __name__ == "__main__":
    # Small shapes consistent with the module: Linear(in=32 -> out=32), rank=8, N=8.
    N, in_features, out_features, rank = 8, 32, 32, 8
    d_init_val = 0.1

    keys = jax.random.split(jax.random.PRNGKey(0), 6)

    x = jax.random.normal(keys[0], (N, in_features), jnp.float32)

    # Frozen original Linear params (kaiming-uniform like nn.Linear's default).
    W = _kaiming_uniform(keys[1], (out_features, in_features))
    b0 = jax.random.uniform(
        keys[2], (out_features,), jnp.float32,
        minval=-1.0 / math.sqrt(in_features), maxval=1.0 / math.sqrt(in_features))

    # Frozen VeRA projections.
    A_frozen = _kaiming_uniform(keys[3], (rank, in_features))
    B_frozen = _kaiming_uniform(keys[4], (out_features, rank))

    # Trainable vectors. The PyTorch __init__ uses b_vec = zeros; we use small
    # deterministic non-zero values so the adapter path is actually exercised.
    d_vec = jnp.full((rank,), d_init_val, jnp.float32)
    b_vec = 0.05 * jax.random.normal(keys[5], (out_features,), jnp.float32)

    prep = prepare_vera_weights(W, b0, A_frozen, B_frozen, d_vec, b_vec)
    out = vera_apply(prep, x)
    out = jax.block_until_ready(out)

    # Pure-JAX f32 reference of the exact PyTorch math.
    orig = x @ W.T + b0
    delta = jnp.diag(b_vec) @ B_frozen @ jnp.diag(d_vec) @ A_frozen @ x.T
    ref = orig + delta.T

    assert out.shape == (N, out_features)
    # bf16 streaming of x / W with f32 accumulation -> loosened tolerance.
    assert jnp.allclose(out, ref, atol=5e-2, rtol=5e-2), "mismatch vs reference"
    print("KERNEL_OK")
</pallas_src>

<mosaic_0001>
module attributes {stable_mosaic.version = 11 : i64} {
  func.func @vera_kernel(%arg0: i32, %arg1: i32, %arg2: i32, %arg3: memref<16x128xbf16, #tpu.memory_space<vmem>>, %arg4: memref<128x128xbf16, #tpu.memory_space<vmem>>, %arg5: memref<1x128xf32, #tpu.memory_space<vmem>>, %arg6: memref<16x8xbf16, #tpu.memory_space<vmem>>, %arg7: memref<8x128xbf16, #tpu.memory_space<vmem>>, %arg8: memref<16x128xf32, #tpu.memory_space<vmem>>) attributes {dimension_semantics = [#tpu.dimension_semantics<parallel>, #tpu.dimension_semantics<parallel>, #tpu.dimension_semantics<arbitrary>], iteration_bounds = array<i64: 1, 1, 1>, scalar_prefetch = 0 : i64, scratch_operands = 0 : i64, tpu.core_type = #tpu.core_type<tc>, window_params = [{transform_indices = @transform_0, window_bounds = array<i64: 16, 128>}, {transform_indices = @transform_1, window_bounds = array<i64: 128, 128>}, {transform_indices = @transform_2, window_bounds = array<i64: 1, 128>}, {transform_indices = @transform_3, window_bounds = array<i64: 16, 8>}, {transform_indices = @transform_4, window_bounds = array<i64: 8, 128>}, {transform_indices = @transform_5, window_bounds = array<i64: 16, 128>}]} {
    %c0_i32 = arith.constant 0 : i32
    %0 = arith.cmpi eq, %arg2, %c0_i32 : i32
    %1 = arith.extui %0 : i1 to i32
    %c0_i32_0 = arith.constant 0 : i32
    %2 = arith.cmpi ne, %1, %c0_i32_0 : i32
    scf.if %2 {
      %c0_8 = arith.constant 0 : index
      %c0_9 = arith.constant 0 : index
      %9 = vector.load %arg6[%c0_8, %c0_9] : memref<16x8xbf16, #tpu.memory_space<vmem>>, vector<16x8xbf16>
      %c0_10 = arith.constant 0 : index
      %c0_11 = arith.constant 0 : index
      %10 = vector.load %arg7[%c0_10, %c0_11] : memref<8x128xbf16, #tpu.memory_space<vmem>>, vector<8x128xbf16>
      %cst_12 = arith.constant dense<0.000000e+00> : vector<16x128xf32>
      %11 = tpu.matmul %9, %10, %cst_12 {dimension_numbers = #tpu.dot_dimension_numbers<[1], [0], [0], [1], [0, 0, 1, 1], [], []>} : vector<16x8xbf16>, vector<8x128xbf16>, vector<16x128xf32> -> vector<16x128xf32>
      %c0_13 = arith.constant 0 : index
      %c0_14 = arith.constant 0 : index
      %12 = vector.load %arg5[%c0_13, %c0_14] : memref<1x128xf32, #tpu.memory_space<vmem>>, vector<1x128xf32>
      %13 = vector.broadcast %12 : vector<1x128xf32> to vector<16x128xf32>
      %14 = arith.addf %11, %13 : vector<16x128xf32>
      %c0_15 = arith.constant 0 : index
      %c0_16 = arith.constant 0 : index
      %15 = vector.load %arg8[%c0_15, %c0_16] : memref<16x128xf32, #tpu.memory_space<vmem>>, vector<16x128xf32>
      tpu.vector_store %arg8[%c0_15, %c0_16], %14 {strides = array<i32>} : memref<16x128xf32, #tpu.memory_space<vmem>>, vector<16x128xf32>,
    } else {
    }
    %c0 = arith.constant 0 : index
    %c0_1 = arith.constant 0 : index
    %3 = vector.load %arg8[%c0, %c0_1] : memref<16x128xf32, #tpu.memory_space<vmem>>, vector<16x128xf32>
    %c0_2 = arith.constant 0 : index
    %c0_3 = arith.constant 0 : index
    %4 = vector.load %arg3[%c0_2, %c0_3] : memref<16x128xbf16, #tpu.memory_space<vmem>>, vector<16x128xbf16>
    %c0_4 = arith.constant 0 : index
    %c0_5 = arith.constant 0 : index
    %5 = vector.load %arg4[%c0_4, %c0_5] : memref<128x128xbf16, #tpu.memory_space<vmem>>, vector<128x128xbf16>
    %cst = arith.constant dense<0.000000e+00> : vector<16x128xf32>
    %6 = tpu.matmul %4, %5, %cst {dimension_numbers = #tpu.dot_dimension_numbers<[1], [0], [0], [1], [0, 0, 1, 1], [], []>} : vector<16x128xbf16>, vector<128x128xbf16>, vector<16x128xf32> -> vector<16x128xf32>
    %7 = arith.addf %3, %6 : vector<16x128xf32>
    %c0_6 = arith.constant 0 : index
    %c0_7 = arith.constant 0 : index
    %8 = vector.load %arg8[%c0_6, %c0_7] : memref<16x128xf32, #tpu.memory_space<vmem>>, vector<16x128xf32>
    tpu.vector_store %arg8[%c0_6, %c0_7], %7 {strides = array<i32>} : memref<16x128xf32, #tpu.memory_space<vmem>>, vector<16x128xf32>,
    return
  }
  func.func @transform_0(%arg0: i32, %arg1: i32, %arg2: i32) -> (i32, i32) {
    %c0_i32 = arith.constant 0 : i32
    return %arg0, %arg2 : i32, i32
  }
  func.func @transform_1(%arg0: i32, %arg1: i32, %arg2: i32) -> (i32, i32) {
    %c0_i32 = arith.constant 0 : i32
    return %arg2, %arg1 : i32, i32
  }
  func.func @transform_2(%arg0: i32, %arg1: i32, %arg2: i32) -> (i32, i32) {
    %c0_i32 = arith.constant 0 : i32
    %c0_i32_0 = arith.constant 0 : i32
    return %c0_i32, %arg1 : i32, i32
  }
  func.func @transform_3(%arg0: i32, %arg1: i32, %arg2: i32) -> (i32, i32) {
    %c0_i32 = arith.constant 0 : i32
    %c0_i32_0 = arith.constant 0 : i32
    return %arg0, %c0_i32 : i32, i32
  }
  func.func @transform_4(%arg0: i32, %arg1: i32, %arg2: i32) -> (i32, i32) {
    %c0_i32 = arith.constant 0 : i32
    %c0_i32_0 = arith.constant 0 : i32
    return %c0_i32, %arg1 : i32, i32
  }
  func.func @transform_5(%arg0: i32, %arg1: i32, %arg2: i32) -> (i32, i32) {
    %c0_i32 = arith.constant 0 : i32
    return %arg0, %arg1 : i32, i32
  }
}

</mosaic_0001>

<llo_original>
// kernel: tpu_custom_call.1
$region0: #{tpu_custom_call.1}
  #allocation0 [shape = 'u32[]', space=smem, size = 0x4, offset = 0x4, fixed_abs, tag = 'smem constant byte address 0x4 - core index']
  #allocation1 [shape = 'u32[144,128]{1,0:T(1,128)}', space=vmem, size = 0x12000, scoped, tag = 'internal scratch']
  %s0 = inlined_call_operand.vmem [shape: bf16[16,128], index: 0, kind: input, shape index: {}]
  %s1 = inlined_call_operand.hbm [shape: bf16[128,128], index: 1, kind: input, shape index: {}]
  %s2 = inlined_call_operand.vmem [shape: f32[1,128], index: 2, kind: input, shape index: {}]
  %s3 = inlined_call_operand.vmem [shape: bf16[16,8], index: 3, kind: input, shape index: {}]
  %s4 = inlined_call_operand.vmem [shape: bf16[8,128], index: 4, kind: input, shape index: {}]
  %s5 = inlined_call_operand.hbm [shape: f32[16,128], index: 5, kind: output, shape index: {}]
  %s6 = sld [smem:[#allocation0]]
  $region38: #{tpu_custom_call.1} parent=0
    _
  %s8 = ssub.s32 1, %s6
  %s9 = scalar_select 0, %s8, %s6
  $region1: #{tpu_custom_call.1} parent=0
    #allocation2 [shape = 'u8[32768]{0}', space=vmem, size = 0x8000, scoped, tag = 'input window, operand 1, single buffered']
    #allocation3 [shape = 's32[1]{0}', space=sflag, size = 0x4, scoped, tag = 'scoped memory for tpu_custom_call.1']
    #allocation4 [shape = 's32[1]{0}', space=sflag, size = 0x4, scoped, tag = 'scoped memory for tpu_custom_call.1']
    #allocation5 [shape = 'u8[8192]{0}', space=vmem, size = 0x2000, scoped, tag = 'output window, operand 0, single buffered']
    %10 = vsyncpa [#allocation3], 0
    %11 = vsyncpa [#allocation4], 0
    // Predicated region
    $region2: #{tpu_custom_call.1} parent=1 // pred_check
      _
    $region3: #{tpu_custom_call.1} parent=1 // pred_check_branch
      %13 = sbr.rel (0) target = $region5
    $region4: #{tpu_custom_call.1} parent=1 // pred_region
      _
    $region5: #{tpu_custom_call.1} parent=1 // pred_fallthru
      _
    // Predicated region
    $region6: #{tpu_custom_call.1} parent=1 // pred_check
      _
    $region7: #{tpu_custom_call.1} parent=1 // pred_check_branch
      %15 = sbr.rel (0) target = $region9
    $region8: #{tpu_custom_call.1} parent=1 // pred_region
      %s17 = ssub.s32 1024, 1024
      %18 = vsyncadd [#allocation3], %s17
      %s19 = sshll.u32 [#allocation2], 4
      %s20 = int_to_ptr.vmem [resolvable:$true] %s19
      %25 = dma.hbm_to_vmem [thread:$0]  %s1, 1024, %s20, [#allocation3], 64, 64, 4
    $region9: #{tpu_custom_call.1} parent=1 // pred_fallthru
      _
    // Predicated region
    $region10: #{tpu_custom_call.1} parent=1 // pred_check
      _
    $region11: #{tpu_custom_call.1} parent=1 // pred_check_branch
      %27 = sbr.rel (0) target = $region13
    $region12: #{tpu_custom_call.1} parent=1 // pred_region
      _
    $region13: #{tpu_custom_call.1} parent=1 // pred_fallthru
      _
    // Predicated region
    $region14: #{tpu_custom_call.1} parent=1 // pred_check
      _
    $region15: #{tpu_custom_call.1} parent=1 // pred_check_branch
      %29 = sbr.rel (0) target = $region17
    $region16: #{tpu_custom_call.1} parent=1 // pred_region
      _
    $region17: #{tpu_custom_call.1} parent=1 // pred_fallthru
      _
    // Predicated region
    $region18: #{tpu_custom_call.1} parent=1 // pred_check
      _
    $region19: #{tpu_custom_call.1} parent=1 // pred_check_branch
      %31 = sbr.rel (0) target = $region21
    $region20: #{tpu_custom_call.1} parent=1 // pred_region
      _
    $region21: #{tpu_custom_call.1} parent=1 // pred_fallthru
      _
    // Predicated region
    $region22: #{tpu_custom_call.1} parent=1 // pred_check
      _
    $region23: #{tpu_custom_call.1} parent=1 // pred_check_branch
      %33 = sbr.rel (0) target = $region25
    $region24: #{tpu_custom_call.1} parent=1 // pred_region
      %34 = dma.done [#allocation3], 1024
    $region25: #{tpu_custom_call.1} parent=1 // pred_fallthru
      _
    %p36 = scmp.eq.s32.totalorder 0, 0
    // Predicated region
    $region26: #{tpu_custom_call.1} parent=1 // pred_check
      %p37 = pneg %p36
    $region27: #{tpu_custom_call.1} parent=1 // pred_check_branch
      %39 = sbr.rel (%p37) target = $region29
    $region28: #{tpu_custom_call.1} parent=1 // pred_region
      %v40 = vld [vmem:[%s3] sm:$0xf]
      %v41 = vld [vmem:[%s3 + $0x4] sm:$0xf]
      %v42 = vld [vmem:[%s4] sm:$0xf]
      %v43 = vld [vmem:[%s2] sm:$0x1]
      %v45 = vlaneseq
      %v46 = vshrl.u32 %v45, 7
      %v47 = vsub.s32 0, %v46
      %v48 = vrot.slane %v43, %v47
      %v52 = vunpack.c.l.b16 %v40
      %v53 = vunpack.c.l.b16 %v41
      %v54 = vpack.c.b16 %v53, %v52
      %vm55 = vcmask 64512
      %v57 = vsel %vm55, %v54, 0
      %vm59 = vcmask 1043456
      %v61 = vsel %vm59, %v42, 0
      %63 = vmatprep.subr.bf16.mxu0 0
      %64 = vmatpush1.bf16.msra.mxu0 0
      %65 = vmatprep.subr.bf16.mxu0 0
      %66 = vmatpush1.bf16.msra.mxu0 0
      %67 = vmatprep.subr.bf16.mxu0 0
      %68 = vmatpush1.bf16.msra.mxu0 0
      %69 = vmatprep.subr.bf16.mxu0 0
      %70 = vmatpush1.bf16.msra.mxu0 0
      %71 = vmatprep.subr.bf16.mxu0 0
      %72 = vmatpush1.bf16.msra.mxu0 0
      %73 = vmatprep.subr.bf16.mxu0 0
      %74 = vmatpush1.bf16.msra.mxu0 0
      %75 = vmatprep.subr.bf16.mxu0 0
      %76 = vmatpush1.bf16.msra.mxu0 0
      %77 = vmatprep.subr.bf16.mxu0 0
      %78 = vmatpush1.bf16.msra.mxu0 %v61
      %79 = vmatprep.subr.bf16.mxu0 0
      %80 = vmatpush2.bf16.msra.mxu0 0
      %81 = vmatprep.subr.bf16.mxu0 0
      %82 = vmatpush2.bf16.msra.mxu0 0
      %83 = vmatprep.subr.bf16.mxu0 0
      %84 = vmatpush2.bf16.msra.mxu0 0
      %85 = vmatprep.subr.bf16.mxu0 0
      %86 = vmatpush2.bf16.msra.mxu0 0
      %87 = vmatprep.subr.bf16.mxu0 0
      %88 = vmatpush2.bf16.msra.mxu0 0
      %89 = vmatprep.subr.bf16.mxu0 0
      %90 = vmatpush2.bf16.msra.mxu0 0
      %91 = vmatprep.subr.bf16.mxu0 0
      %92 = vmatpush2.bf16.msra.mxu0 0
      %93 = vmatprep.subr.bf16.mxu0 0
      %94 = vmatpush2.bf16.msra.mxu0 0
      %95 = vmatprep.mubr.bf16.mxu0 0
      %96 = vmatmul.mubr.bf16.gmra.mxu0 %v57
      %v97 = vpop.f32.mrf.mxu0
      %v98 = vadd.f32 %v48, %v97
      %v99 = vpop.f32.mrf.mxu0
      %v100 = vpop.f32.mrf.mxu0
      %v101 = vadd.f32 %v48, %v100
      %v102 = vpop.f32.mrf.mxu0
      %103 = vdwg.mxu0
      %104 = vst [vmem:[#allocation5] sm:$0xff] %v98
      %105 = vst [vmem:[#allocation5 + $0x8] sm:$0xff] %v101
    $region29: #{tpu_custom_call.1} parent=1 // pred_fallthru
      _
    %v106 = vld [vmem:[#allocation5] sm:$0xff]
    %v107 = vld [vmem:[#allocation5 + $0x8] sm:$0xff]
    %v108 = vld [vmem:[%s0] sm:$0xf]
    %v109 = vld [vmem:[%s0 + $0x4] sm:$0xf]
    %v110 = vld [vmem:[#allocation2] sm:$0xf]
    %v111 = vld [vmem:[#allocation2 + $0x4] sm:$0xf]
    %v112 = vld [vmem:[#allocation2 + $0x8] sm:$0xf]
    %v113 = vld [vmem:[#allocation2 + $0xc] sm:$0xf]
    %v114 = vld [vmem:[#allocation2 + $0x10] sm:$0xf]
    %v115 = vld [vmem:[#allocation2 + $0x14] sm:$0xf]
    %v116 = vld [vmem:[#allocation2 + $0x18] sm:$0xf]
    %v117 = vld [vmem:[#allocation2 + $0x1c] sm:$0xf]
    %v118 = vld [vmem:[#allocation2 + $0x20] sm:$0xf]
    %v119 = vld [vmem:[#allocation2 + $0x24] sm:$0xf]
    %v120 = vld [vmem:[#allocation2 + $0x28] sm:$0xf]
    %v121 = vld [vmem:[#allocation2 + $0x2c] sm:$0xf]
    %v122 = vld [vmem:[#allocation2 + $0x30] sm:$0xf]
    %v123 = vld [vmem:[#allocation2 + $0x34] sm:$0xf]
    %v124 = vld [vmem:[#allocation2 + $0x38] sm:$0xf]
    %v125 = vld [vmem:[#allocation2 + $0x3c] sm:$0xf]
    %v128 = vunpack.c.l.b16 %v108
    %v129 = vunpack.c.l.b16 %v109
    %v130 = vpack.c.b16 %v129, %v128
    %v148 = vunpack.c.l.b16 %v110
    %v149 = vunpack.c.l.b16 %v111
    %v150 = vunpack.c.l.b16 %v112
    %v151 = vunpack.c.l.b16 %v113
    %v152 = vunpack.c.l.b16 %v114
    %v153 = vunpack.c.l.b16 %v115
    %v154 = vunpack.c.l.b16 %v116
    %v155 = vunpack.c.l.b16 %v117
    %v156 = vunpack.c.l.b16 %v118
    %v157 = vunpack.c.l.b16 %v119
    %v158 = vunpack.c.l.b16 %v120
    %v159 = vunpack.c.l.b16 %v121
    %v160 = vunpack.c.l.b16 %v122
    %v161 = vunpack.c.l.b16 %v123
    %v162 = vunpack.c.l.b16 %v124
    %v163 = vunpack.c.l.b16 %v125
    %v164 = vpack.c.b16 %v149, %v148
    %v165 = vpack.c.b16 %v151, %v150
    %v166 = vpack.c.b16 %v153, %v152
    %v167 = vpack.c.b16 %v155, %v154
    %v168 = vpack.c.b16 %v157, %v156
    %v169 = vpack.c.b16 %v159, %v158
    %v170 = vpack.c.b16 %v161, %v160
    %v171 = vpack.c.b16 %v163, %v162
    %180 = vmatprep.subr.bf16.mxu0 0
    %181 = vmatpush1.bf16.msra.mxu0 %v171
    %182 = vmatprep.subr.bf16.mxu0 0
    %183 = vmatpush1.bf16.msra.mxu0 %v170
    %184 = vmatprep.subr.bf16.mxu0 0
    %185 = vmatpush1.bf16.msra.mxu0 %v169
    %186 = vmatprep.subr.bf16.mxu0 0
    %187 = vmatpush1.bf16.msra.mxu0 %v168
    %188 = vmatprep.subr.bf16.mxu0 0
    %189 = vmatpush1.bf16.msra.mxu0 %v167
    %190 = vmatprep.subr.bf16.mxu0 0
    %191 = vmatpush1.bf16.msra.mxu0 %v166
    %192 = vmatprep.subr.bf16.mxu0 0
    %193 = vmatpush1.bf16.msra.mxu0 %v165
    %194 = vmatprep.subr.bf16.mxu0 0
    %195 = vmatpush1.bf16.msra.mxu0 %v164
    %196 = vmatprep.subr.bf16.mxu0 0
    %197 = vmatpush2.bf16.msra.mxu0 0
    %198 = vmatprep.subr.bf16.mxu0 0
    %199 = vmatpush2.bf16.msra.mxu0 0
    %200 = vmatprep.subr.bf16.mxu0 0
    %201 = vmatpush2.bf16.msra.mxu0 0
    %202 = vmatprep.subr.bf16.mxu0 0
    %203 = vmatpush2.bf16.msra.mxu0 0
    %204 = vmatprep.subr.bf16.mxu0 0
    %205 = vmatpush2.bf16.msra.mxu0 0
    %206 = vmatprep.subr.bf16.mxu0 0
    %207 = vmatpush2.bf16.msra.mxu0 0
    %208 = vmatprep.subr.bf16.mxu0 0
    %209 = vmatpush2.bf16.msra.mxu0 0
    %210 = vmatprep.subr.bf16.mxu0 0
    %211 = vmatpush2.bf16.msra.mxu0 0
    %212 = vmatprep.mubr.bf16.mxu0 0
    %213 = vmatmul.mubr.bf16.gmra.mxu0 %v130
    %v214 = vpop.f32.mrf.mxu0
    %v215 = vadd.f32 0.0, %v214
    %v216 = vpop.f32.mrf.mxu0
    %v217 = vpop.f32.mrf.mxu0
    %v218 = vadd.f32 0.0, %v217
    %v219 = vpop.f32.mrf.mxu0
    %220 = vdwg.mxu0
    %v221 = vadd.f32 %v106, %v215
    %v222 = vadd.f32 %v107, %v218
    %223 = vst [vmem:[#allocation5] sm:$0xff] %v221
    %224 = vst [vmem:[#allocation5 + $0x8] sm:$0xff] %v222
    // Predicated region
    $region30: #{tpu_custom_call.1} parent=1 // pred_check
      _
    $region31: #{tpu_custom_call.1} parent=1 // pred_check_branch
      %226 = sbr.rel (0) target = $region33
    $region32: #{tpu_custom_call.1} parent=1 // pred_region
      %s228 = ssub.s32 256, 256
      %229 = vsyncadd [#allocation4], %s228
      %s230 = sshll.u32 [#allocation5], 4
      %s231 = int_to_ptr.vmem [resolvable:$true] %s230
      %236 = dma.vmem_to_hbm [thread:$0]  %s231, 256, %s5, [#allocation4], 128, 128, 8
    $region33: #{tpu_custom_call.1} parent=1 // pred_fallthru
      _
    // Predicated region
    $region34: #{tpu_custom_call.1} parent=1 // pred_check
      _
    $region35: #{tpu_custom_call.1} parent=1 // pred_check_branch
      %238 = sbr.rel (0) target = $region37
    $region36: #{tpu_custom_call.1} parent=1 // pred_region
      %239 = dma.done [#allocation4], 256
    $region37: #{tpu_custom_call.1} parent=1 // pred_fallthru
      _
    %240 = vsyncpa [#allocation3], 1
    %241 = vsyncpa [#allocation4], 1

</llo_original>
